<compile_context>
chip_gen: v7x
topology: tpu7x:2x2x1
jax: 0.10.0
libtpu: 0.0.40
codegen_flags: <defaults>
</compile_context>

<pallas_src>
import functools

import jax
import jax.numpy as jnp
from jax.experimental import pallas as pl
from jax.experimental.pallas import tpu as pltpu


def _grid_gen_kernel(m_ref, out_ref, *, inv_h, inv_w):
    """One (batch, row-tile) block.

    m_ref   : SMEM (N*9,) f32 -- per-batch 3x3 transforms, row-major flattened.
    out_ref : VMEM (1, tile_h, 2*W) f32 -- x/y interleaved along lanes
              (even lane = x, odd lane = y) == row-major (tile_h, W, 2).
    """
    n = pl.program_id(0)          # batch index
    t = pl.program_id(1)          # row-tile index
    tile_h = out_ref.shape[1]
    w2 = out_ref.shape[2]

    base = n * 9
    m00 = m_ref[base + 0]; m01 = m_ref[base + 1]; m02 = m_ref[base + 2]
    m10 = m_ref[base + 3]; m11 = m_ref[base + 4]; m12 = m_ref[base + 5]
    m20 = m_ref[base + 6]; m21 = m_ref[base + 7]; m22 = m_ref[base + 8]

    # Fold the base-grid scaling (col/W, row/H), the final (g-0.5)*2 affine and
    # this block's row offset into the nine scalars -- done once per block.
    r0 = (t * tile_h).astype(jnp.float32)
    ax_c = 2.0 * m00 * inv_w            # x numerator: column coefficient
    ax_r = 2.0 * m01 * inv_h            #              row coefficient
    ax_0 = 2.0 * m02 + ax_r * r0        #              constant (tile offset folded)
    ay_c = 2.0 * m10 * inv_w
    ay_r = 2.0 * m11 * inv_h
    ay_0 = 2.0 * m12 + ay_r * r0
    aw_c = m20 * inv_w
    aw_r = m21 * inv_h
    aw_0 = m22 + aw_r * r0

    # Per-lane constants (length 2W): lane l -> pixel column l>>1, channel l&1.
    lane = jax.lax.broadcasted_iota(jnp.int32, (1, w2), 1)
    col_f = (lane >> 1).astype(jnp.float32)
    is_x = (lane & 1) == 0
    num_lane = jnp.where(is_x, ax_c * col_f + ax_0, ay_c * col_f + ay_0)
    row_coef = jnp.where(is_x, ax_r, ay_r)
    wp_lane = aw_c * col_f + aw_0

    # Per-row term (length tile_h).
    row_f = jax.lax.broadcasted_iota(jnp.int32, (tile_h, 1), 0).astype(jnp.float32)

    # Full-tile vector work: 2 FMAs (numerator) + 1 FMA (w) + EUP reciprocal
    # (+ 1 Newton step) + 1 FMA (final affine) per output element.
    num = num_lane + row_coef * row_f
    wp = wp_lane + aw_r * row_f
    inv = pl.reciprocal(wp, approx=True)
    inv = inv * (2.0 - wp * inv)        # one Newton step -> ~full f32 accuracy
    out_ref[0, :, :] = (num * inv - 1.0).astype(out_ref.dtype)


def _choose_tile_h(n, h, w, target_block_bytes=4 << 20):
    """Rows per block: ~4 MiB output blocks (only pipelined stream, so x2 for
    double buffering); for N == 1 keep >= 2 row tiles so both v7x TCs get work."""
    rows = max(1, target_block_bytes // (2 * w * 4))
    if n == 1 and h >= 16:
        rows = min(rows, max(8, ((h // 2) // 8) * 8))
    if rows >= h:
        return h
    return int(max(8, (rows // 8) * 8))


def projective_grid_generator(M, H, W, *, tile_h=None):
    """M: (N, 3, 3) float -> sampling grid (N, H, W, 2) in (-1, 1)."""
    N = M.shape[0]
    if tile_h is None:
        tile_h = _choose_tile_h(N, H, W)
    tile_h = int(min(tile_h, H))
    if tile_h != H:
        # (8, 128) rule: non-full sublane tiles must be a multiple of 8.
        tile_h = max(8, (tile_h // 8) * 8)
        if tile_h >= H:
            tile_h = H

    grid = (N, pl.cdiv(H, tile_h))
    # 1-D SMEM array (2-D SMEM pads the 9-wide axis to 128 words).
    m_flat = M.astype(jnp.float32).reshape(N * 9)

    kernel = functools.partial(_grid_gen_kernel, inv_h=1.0 / H, inv_w=1.0 / W)

    block_bytes = tile_h * 2 * W * 4
    vmem_limit = int(min(64 << 20, max(16 << 20, 4 * block_bytes)))

    out = pl.pallas_call(
        kernel,
        out_shape=jax.ShapeDtypeStruct((N, H, 2 * W), jnp.float32),
        grid_spec=pltpu.PrefetchScalarGridSpec(
            num_scalar_prefetch=0,
            grid=grid,
            in_specs=[
                # 3x3 matrices live whole in SMEM; read as scalars in-kernel.
                pl.BlockSpec(memory_space=pltpu.MemorySpace.SMEM),
            ],
            out_specs=pl.BlockSpec((1, tile_h, 2 * W), lambda n, t: (n, t, 0)),
        ),
        compiler_params=pltpu.CompilerParams(
            dimension_semantics=("parallel", "parallel"),
            vmem_limit_bytes=vmem_limit,
        ),
    )(m_flat)

    # (N, H, 2W) interleaved == row-major (N, H, W, 2): metadata-only reshape,
    # no transpose / data movement needed.
    return out.reshape(N, H, W, 2)


def make_base_grid(N, H, W, dtype=jnp.float32):
    """Replicates the PyTorch __init__ base_grid (used only for the reference)."""
    lin_w = jnp.linspace(0.0, 1.0 - 1.0 / W, W, dtype=dtype)
    lin_h = jnp.linspace(0.0, 1.0 - 1.0 / H, H, dtype=dtype)
    gx = jnp.broadcast_to(lin_w[None, :], (H, W))
    gy = jnp.broadcast_to(lin_h[:, None], (H, W))
    gz = jnp.ones((H, W), dtype=dtype)
    base = jnp.stack([gx, gy, gz], axis=-1)
    return jnp.broadcast_to(base[None], (N, H, W, 3)).astype(dtype)


if __name__ == "__main__":
    # Small shapes consistent with the module: size_ipm = (N, H, W)
    N, H, W = 2, 16, 16

    key = jax.random.PRNGKey(0)
    # Identity + small perturbation keeps the homogeneous w component away from 0.
    perturb = 0.1 * jax.random.normal(key, (N, 3, 3), dtype=jnp.float32)
    M = jnp.eye(3, dtype=jnp.float32)[None] + perturb

    # Default tiling (single row tile for this small IPM) ...
    out = jax.block_until_ready(projective_grid_generator(M, H, W))
    # ... plus an explicit multi-tile run to exercise the row-offset folding.
    out_tiled = jax.block_until_ready(projective_grid_generator(M, H, W, tile_h=8))

    # Pure-JAX reference mirroring the PyTorch forward exactly.
    base_grid = make_base_grid(N, H, W)
    g_ref = jnp.einsum("npk,nqk->npq", base_grid.reshape(N, H * W, 3), M,
                       precision=jax.lax.Precision.HIGHEST)
    g_ref = (g_ref[:, :, 0:2] / g_ref[:, :, 2:3]).reshape(N, H, W, 2)
    g_ref = (g_ref - 0.5) * 2.0

    assert out.shape == (N, H, W, 2)
    assert jnp.allclose(out, g_ref, atol=1e-4, rtol=1e-4)
    assert jnp.allclose(out_tiled, g_ref, atol=1e-4, rtol=1e-4)

    print("KERNEL_OK")
</pallas_src>

<mosaic_0001>
module attributes {stable_mosaic.version = 11 : i64} {
  func.func @_grid_gen_kernel(%arg0: i32, %arg1: i32, %arg2: memref<18xf32, #tpu.memory_space<smem>>, %arg3: memref<1x16x32xf32, #tpu.memory_space<vmem>>) attributes {dimension_semantics = [#tpu.dimension_semantics<parallel>, #tpu.dimension_semantics<parallel>], iteration_bounds = array<i64: 2, 1>, scalar_prefetch = 0 : i64, scratch_operands = 0 : i64, tpu.core_type = #tpu.core_type<tc>, window_params = [{transform_indices = @transform_0, window_bounds = array<i64: 18>}, {transform_indices = @transform_1, window_bounds = array<i64: 1, 16, 32>}]} {
    %c9_i32 = arith.constant 9 : i32
    %0 = arith.muli %arg0, %c9_i32 : i32
    %c0_i32 = arith.constant 0 : i32
    %1 = arith.addi %0, %c0_i32 : i32
    %2 = arith.index_cast %1 : i32 to index
    %3 = memref.load %arg2[%2] : memref<18xf32, #tpu.memory_space<smem>>
    %c1_i32 = arith.constant 1 : i32
    %4 = arith.addi %0, %c1_i32 : i32
    %5 = arith.index_cast %4 : i32 to index
    %6 = memref.load %arg2[%5] : memref<18xf32, #tpu.memory_space<smem>>
    %c2_i32 = arith.constant 2 : i32
    %7 = arith.addi %0, %c2_i32 : i32
    %8 = arith.index_cast %7 : i32 to index
    %9 = memref.load %arg2[%8] : memref<18xf32, #tpu.memory_space<smem>>
    %c3_i32 = arith.constant 3 : i32
    %10 = arith.addi %0, %c3_i32 : i32
    %11 = arith.index_cast %10 : i32 to index
    %12 = memref.load %arg2[%11] : memref<18xf32, #tpu.memory_space<smem>>
    %c4_i32 = arith.constant 4 : i32
    %13 = arith.addi %0, %c4_i32 : i32
    %14 = arith.index_cast %13 : i32 to index
    %15 = memref.load %arg2[%14] : memref<18xf32, #tpu.memory_space<smem>>
    %c5_i32 = arith.constant 5 : i32
    %16 = arith.addi %0, %c5_i32 : i32
    %17 = arith.index_cast %16 : i32 to index
    %18 = memref.load %arg2[%17] : memref<18xf32, #tpu.memory_space<smem>>
    %c6_i32 = arith.constant 6 : i32
    %19 = arith.addi %0, %c6_i32 : i32
    %20 = arith.index_cast %19 : i32 to index
    %21 = memref.load %arg2[%20] : memref<18xf32, #tpu.memory_space<smem>>
    %c7_i32 = arith.constant 7 : i32
    %22 = arith.addi %0, %c7_i32 : i32
    %23 = arith.index_cast %22 : i32 to index
    %24 = memref.load %arg2[%23] : memref<18xf32, #tpu.memory_space<smem>>
    %c8_i32 = arith.constant 8 : i32
    %25 = arith.addi %0, %c8_i32 : i32
    %26 = arith.index_cast %25 : i32 to index
    %27 = memref.load %arg2[%26] : memref<18xf32, #tpu.memory_space<smem>>
    %c16_i32 = arith.constant 16 : i32
    %28 = arith.muli %arg1, %c16_i32 : i32
    %29 = arith.sitofp %28 : i32 to f32
    %cst = arith.constant 2.000000e+00 : f32
    %30 = arith.mulf %cst, %3 : f32
    %cst_0 = arith.constant 6.250000e-02 : f32
    %31 = arith.mulf %30, %cst_0 : f32
    %cst_1 = arith.constant 2.000000e+00 : f32
    %32 = arith.mulf %cst_1, %6 : f32
    %cst_2 = arith.constant 6.250000e-02 : f32
    %33 = arith.mulf %32, %cst_2 : f32
    %cst_3 = arith.constant 2.000000e+00 : f32
    %34 = arith.mulf %cst_3, %9 : f32
    %35 = arith.mulf %33, %29 : f32
    %36 = arith.addf %34, %35 : f32
    %cst_4 = arith.constant 2.000000e+00 : f32
    %37 = arith.mulf %cst_4, %12 : f32
    %cst_5 = arith.constant 6.250000e-02 : f32
    %38 = arith.mulf %37, %cst_5 : f32
    %cst_6 = arith.constant 2.000000e+00 : f32
    %39 = arith.mulf %cst_6, %15 : f32
    %cst_7 = arith.constant 6.250000e-02 : f32
    %40 = arith.mulf %39, %cst_7 : f32
    %cst_8 = arith.constant 2.000000e+00 : f32
    %41 = arith.mulf %cst_8, %18 : f32
    %42 = arith.mulf %40, %29 : f32
    %43 = arith.addf %41, %42 : f32
    %cst_9 = arith.constant 6.250000e-02 : f32
    %44 = arith.mulf %21, %cst_9 : f32
    %cst_10 = arith.constant 6.250000e-02 : f32
    %45 = arith.mulf %24, %cst_10 : f32
    %46 = arith.mulf %45, %29 : f32
    %47 = arith.addf %27, %46 : f32
    %48 = tpu.iota {dimensions = array<i32: 1>} : vector<1x32xi32>
    %c1_i32_11 = arith.constant 1 : i32
    %49 = vector.broadcast %c1_i32_11 : i32 to vector<1x32xi32>
    %50 = arith.shrsi %48, %49 : vector<1x32xi32>
    %51 = arith.sitofp %50 : vector<1x32xi32> to vector<1x32xf32>
    %c1_i32_12 = arith.constant 1 : i32
    %52 = vector.broadcast %c1_i32_12 : i32 to vector<1x32xi32>
    %53 = arith.andi %48, %52 : vector<1x32xi32>
    %c0_i32_13 = arith.constant 0 : i32
    %54 = vector.broadcast %c0_i32_13 : i32 to vector<1x32xi32>
    %55 = arith.cmpi eq, %53, %54 : vector<1x32xi32>
    %56 = vector.broadcast %31 : f32 to vector<1x32xf32>
    %57 = arith.mulf %56, %51 : vector<1x32xf32>
    %58 = vector.broadcast %36 : f32 to vector<1x32xf32>
    %59 = arith.addf %57, %58 : vector<1x32xf32>
    %60 = vector.broadcast %38 : f32 to vector<1x32xf32>
    %61 = arith.mulf %60, %51 : vector<1x32xf32>
    %62 = vector.broadcast %43 : f32 to vector<1x32xf32>
    %63 = arith.addf %61, %62 : vector<1x32xf32>
    %64 = arith.select %55, %59, %63 : vector<1x32xi1>, vector<1x32xf32>
    %65 = vector.broadcast %33 : f32 to vector<1x32xf32>
    %66 = vector.broadcast %40 : f32 to vector<1x32xf32>
    %67 = arith.select %55, %65, %66 : vector<1x32xi1>, vector<1x32xf32>
    %68 = vector.broadcast %44 : f32 to vector<1x32xf32>
    %69 = arith.mulf %68, %51 : vector<1x32xf32>
    %70 = vector.broadcast %47 : f32 to vector<1x32xf32>
    %71 = arith.addf %69, %70 : vector<1x32xf32>
    %72 = tpu.iota {dimensions = array<i32: 0>} : vector<16x1xi32>
    %73 = arith.sitofp %72 : vector<16x1xi32> to vector<16x1xf32>
    %74 = vector.broadcast %67 : vector<1x32xf32> to vector<16x32xf32>
    %75 = vector.broadcast %73 : vector<16x1xf32> to vector<16x32xf32>
    %76 = arith.mulf %74, %75 : vector<16x32xf32>
    %77 = vector.broadcast %64 : vector<1x32xf32> to vector<16x32xf32>
    %78 = arith.addf %77, %76 : vector<16x32xf32>
    %79 = vector.broadcast %45 : f32 to vector<16x1xf32>
    %80 = arith.mulf %79, %73 : vector<16x1xf32>
    %81 = vector.broadcast %71 : vector<1x32xf32> to vector<16x32xf32>
    %82 = vector.broadcast %80 : vector<16x1xf32> to vector<16x32xf32>
    %83 = arith.addf %81, %82 : vector<16x32xf32>
    %84 = tpu.reciprocal %83 {approx = true} : vector<16x32xf32> -> vector<16x32xf32>
    %85 = arith.mulf %83, %84 : vector<16x32xf32>
    %cst_14 = arith.constant 2.000000e+00 : f32
    %86 = vector.broadcast %cst_14 : f32 to vector<16x32xf32>
    %87 = arith.subf %86, %85 : vector<16x32xf32>
    %88 = arith.mulf %84, %87 : vector<16x32xf32>
    %89 = arith.mulf %78, %88 : vector<16x32xf32>
    %cst_15 = arith.constant 1.000000e+00 : f32
    %90 = vector.broadcast %cst_15 : f32 to vector<16x32xf32>
    %91 = arith.subf %89, %90 : vector<16x32xf32>
    %c0 = arith.constant 0 : index
    %c0_16 = arith.constant 0 : index
    %c0_17 = arith.constant 0 : index
    %92 = vector.load %arg3[%c0, %c0_16, %c0_17] : memref<1x16x32xf32, #tpu.memory_space<vmem>>, vector<1x16x32xf32>
    %93 = vector.shape_cast %92 : vector<1x16x32xf32> to vector<16x32xf32>
    %94 = vector.shape_cast %91 : vector<16x32xf32> to vector<1x16x32xf32>
    tpu.vector_store %arg3[%c0, %c0_16, %c0_17], %94 {strides = array<i32>} : memref<1x16x32xf32, #tpu.memory_space<vmem>>, vector<1x16x32xf32>,
    return
  }
  func.func @transform_0(%arg0: i32, %arg1: i32) -> i32 {
    %c0_i32 = arith.constant 0 : i32
    %c0_i32_0 = arith.constant 0 : i32
    return %c0_i32 : i32
  }
  func.func @transform_1(%arg0: i32, %arg1: i32) -> (i32, i32, i32) {
    %c0_i32 = arith.constant 0 : i32
    %c0_i32_0 = arith.constant 0 : i32
    return %arg0, %arg1, %c0_i32 : i32, i32, i32
  }
}

</mosaic_0001>

<llo_original>
// kernel: tpu_custom_call.1
$region0: #{tpu_custom_call.1}
  #allocation0 [shape = 'u32[]', space=smem, size = 0x4, offset = 0x4, fixed_abs, tag = 'smem constant byte address 0x4 - core index']
  #allocation1 [shape = 'u32[144,128]{1,0:T(1,128)}', space=vmem, size = 0x12000, scoped, tag = 'internal scratch']
  %s0 = inlined_call_operand.hbm [shape: f32[18], index: 0, kind: input, shape index: {}]
  %s1 = inlined_call_operand.hbm [shape: f32[2,16,32], index: 1, kind: output, shape index: {}]
  %s2 = sld [smem:[#allocation0]]
  $region41: #{tpu_custom_call.1} parent=0
    _
  %s4 = ssub.s32 1, %s2
  %s5 = scalar_select 0, %s4, %s2
  $region1: #{tpu_custom_call.1} parent=0
    #allocation2 [shape = 'u8[512]{0}', space=smem, size = 0x200, scoped, tag = 'input window, operand 0, single buffered']
    #allocation3 [shape = 's32[2]{0}', space=sflag, size = 0x8, scoped, tag = 'scoped memory for tpu_custom_call.1']
    #allocation4 [shape = 's32[2]{0}', space=sflag, size = 0x8, scoped, tag = 'scoped memory for tpu_custom_call.1']
    #allocation5 [shape = 'u8[16384]{0}', space=vmem, size = 0x4000, scoped, tag = 'output window, operand 0']
    %6 = vsyncpa [#allocation4], 0
    %7 = vsyncpa [#allocation3], 0
    %s8 = scalar_lea.sflag [#allocation3], 1
    %9 = vsyncpa %s8, 0
    loop: start=0, step=1, limit=4
    $region2: #{tpu_custom_call.1} parent=1 // loop_pre_header
      _
    $region3: #{tpu_custom_call.1} parent=1 // loop_header
      %s11 = sphi 0, %s15
      %p12 = scmp.ge.s32.totalorder %s11, 4
      %s18 = sphi 0, %s30
      %s19 = sphi 0, %s26
      %s20 = sphi 0, %s18
      %s21 = sphi 0, %s19
      %s22 = sphi 0, %s20
      %s23 = sphi 0, %s21
      %s31 = sphi 0, %s31
      %s33 = sphi 0, %s31
      %s34 = sphi 0, %s33
      %s48 = sphi 0, %s34
      %s56 = sphi 0, %s58
      %s59 = sphi 0, %s56
      %s60 = sphi 0, %s59
      %s76 = sphi 0, %s60
    $region4: #{tpu_custom_call.1} parent=1 // loop_header_branch
      %14 = sbr.rel (%p12) target = $region8
    $region5: #{tpu_custom_call.1} parent=1 // loop_body
      %s16 = ssub.s32 %s11, 1
      %s17 = ssub.s32 %s11, 2
      %s24 = sadd.s32 1, %s19
      %p25 = scmp.ge.s32.totalorder %s24, 1
      %s26 = scalar_select %p25, 0, %s24
      %s27 = sadd.s32 1, %s18
      %s28 = scalar_select %p25, %s27, %s18
      %p29 = scmp.ge.s32.totalorder %s28, 2
      %s30 = scalar_select %p29, 0, %s28
      %s32 = sadd.s32 %s31, 1
      %p35 = scmp.eq.s32.totalorder %s11, 1
      %p36 = scmp.ne.s32.totalorder %s31, %s33
      %p37 = scmp.eq.s32.totalorder %s11, 0
      %p38 = por %p36, %p37
      %p39 = scmp.ne.s32.totalorder %s31, %s33
      %p40 = scmp.eq.s32.totalorder %s16, 1
      %p41 = por %p39, %p40
      %p42 = scmp.ne.s32.totalorder %s33, %s34
      %p43 = scmp.eq.s32.totalorder %s16, 0
      %p44 = por %p42, %p43
      %p45 = scmp.ne.s32.totalorder %s33, %s34
      %p46 = scmp.eq.s32.totalorder %s17, 1
      %p47 = por %p45, %p46
      %p49 = scmp.ne.s32.totalorder %s34, %s48
      %p50 = scmp.eq.s32.totalorder %s17, 0
      %p51 = por %p49, %p50
      %s52 = ssub.s32 %s18, %s30
      %s53 = ssub.s32 %s19, %s26
      %s54 = sor.u32 %s52, %s53
      %p55 = scmp.eq.s32.totalorder %s54, 0
      %s57 = sadd.s32 %s56, 1
      %s58 = scalar_select %p55, %s56, %s57
      %p61 = pneg %p55
      %p62 = scmp.eq.s32.totalorder %s11, 1
      %p63 = por %p61, %p62
      %p64 = scmp.ne.s32.totalorder %s56, %s59
      %p65 = scmp.eq.s32.totalorder %s11, 0
      %p66 = por %p64, %p65
      %p67 = scmp.ne.s32.totalorder %s56, %s59
      %p68 = scmp.eq.s32.totalorder %s16, 1
      %p69 = por %p67, %p68
      %p70 = scmp.ne.s32.totalorder %s59, %s60
      %p71 = scmp.eq.s32.totalorder %s16, 0
      %p72 = por %p70, %p71
      %p73 = scmp.ne.s32.totalorder %s59, %s60
      %p74 = scmp.eq.s32.totalorder %s17, 1
      %p75 = por %p73, %p74
      %p77 = scmp.ne.s32.totalorder %s60, %s76
      %p78 = scmp.eq.s32.totalorder %s17, 0
      %p79 = por %p77, %p78
      %p80 = scmp.le.s32.totalorder 1, %s11
      %p81 = scmp.lt.s32.totalorder %s11, 3
      %p82 = pnand %p80, %p81
      %p83 = pneg %p82
      // Predicated region
      $region9: #{tpu_custom_call.1} parent=5 // pred_check
        _
      $region10: #{tpu_custom_call.1} parent=5 // pred_check_branch
        %85 = sbr.rel (%p82) target = $region12
      $region11: #{tpu_custom_call.1} parent=5 // pred_region
        %s86 = ssub.s32 %s11, 1
        // Predicated region
        $region13: #{tpu_custom_call.1} parent=11 // pred_check
          %p87 = pneg %p44
        $region14: #{tpu_custom_call.1} parent=11 // pred_check_branch
          %89 = sbr.rel (%p87) target = $region16
        $region15: #{tpu_custom_call.1} parent=11 // pred_region
          %s91 = ssub.s32 16, 16
          %92 = vsyncadd [#allocation4], %s91
          %95 = dma.hbm_to_smem %s0, 16, [#allocation2], [#allocation4]
        $region16: #{tpu_custom_call.1} parent=11 // pred_fallthru
          _
      $region12: #{tpu_custom_call.1} parent=5 // pred_fallthru
        _
      %p96 = scmp.lt.s32.totalorder %s11, 2
      // Predicated region
      $region17: #{tpu_custom_call.1} parent=5 // pred_check
        %p97 = pneg %p96
      $region18: #{tpu_custom_call.1} parent=5 // pred_check_branch
        %99 = sbr.rel (%p97) target = $region20
      $region19: #{tpu_custom_call.1} parent=5 // pred_region
        _
      $region20: #{tpu_custom_call.1} parent=5 // pred_fallthru
        _
      %p100 = scmp.le.s32.totalorder 1, %s11
      %p101 = scmp.lt.s32.totalorder %s11, 3
      %p102 = pnand %p100, %p101
      %p103 = pneg %p102
      // Predicated region
      $region21: #{tpu_custom_call.1} parent=5 // pred_check
        _
      $region22: #{tpu_custom_call.1} parent=5 // pred_check_branch
        %105 = sbr.rel (%p102) target = $region24
      $region23: #{tpu_custom_call.1} parent=5 // pred_region
        %s106 = ssub.s32 %s11, 1
        // Predicated region
        $region25: #{tpu_custom_call.1} parent=23 // pred_check
          %p107 = pneg %p44
        $region26: #{tpu_custom_call.1} parent=23 // pred_check_branch
          %109 = sbr.rel (%p107) target = $region28
        $region27: #{tpu_custom_call.1} parent=23 // pred_region
          %110 = dma.done [#allocation4], 16
        $region28: #{tpu_custom_call.1} parent=23 // pred_fallthru
          _
        %111 = sfence
        %p112 = pneg %p44
        %p113 = pneg %p41
        %p114 = pneg %p72
        %p115 = pneg %p69
        %s116 = sand.u32 %s59, 1
        %s117 = scalar_lea.sflag [#allocation3], %s116
        %s118 = sand.u32 %s59, 1
        %s119 = smul.addr %s118, 16
        %s120 = scalar_lea.vmem [#allocation5], %s119
        %s121 = smul.u32 2, %s21
        %s122 = smul.u32 %s20, 9
        %s123 = sld [smem:[#allocation2 + %s122]]
        %s124 = sadd.s32 %s122, 1
        %s125 = sld [smem:[#allocation2 + %s124]]
        %s126 = sadd.s32 %s122, 2
        %s127 = sld [smem:[#allocation2 + %s126]]
        %s128 = sadd.s32 %s122, 3
        %s129 = sld [smem:[#allocation2 + %s128]]
        %s130 = sadd.s32 %s122, 4
        %s131 = sld [smem:[#allocation2 + %s130]]
        %s132 = sadd.s32 %s122, 5
        %s133 = sld [smem:[#allocation2 + %s132]]
        %s134 = sadd.s32 %s122, 6
        %s135 = sld [smem:[#allocation2 + %s134]]
        %s136 = sadd.s32 %s122, 7
        %s137 = sld [smem:[#allocation2 + %s136]]
        %s138 = sadd.s32 %s122, 8
        %s139 = sld [smem:[#allocation2 + %s138]]
        %s140 = smul.u32 %s21, 16
        %s141 = scvt.s32.f32 %s140
        %s142 = smul.f32 %s123, 2.0
        %s143 = smul.f32 %s142, 0.0625
        %s144 = smul.f32 %s125, 2.0
        %s145 = smul.f32 %s144, 0.0625
        %s146 = smul.f32 %s127, 2.0
        %s147 = smul.f32 %s145, %s141
        %s148 = sadd.f32 %s146, %s147
        %s149 = smul.f32 %s129, 2.0
        %s150 = smul.f32 %s149, 0.0625
        %s151 = smul.f32 %s131, 2.0
        %s152 = smul.f32 %s151, 0.0625
        %s153 = smul.f32 %s133, 2.0
        %s154 = smul.f32 %s152, %s141
        %s155 = sadd.f32 %s153, %s154
        %s156 = smul.f32 %s135, 0.0625
        %s157 = smul.f32 %s137, 0.0625
        %s158 = smul.f32 %s157, %s141
        %s159 = sadd.f32 %s139, %s158
        %v160 = vlaneseq
        %v161 = vand.u32 %v160, 127
        %v162 = vshra.s32 %v161, 1
        %v163 = vcvt.s32.f32 %v162
        %v164 = vand.u32 %v161, 1
        %vm165 = vcmp.eq.s32.totalorder %v164, 0
        %v166 = vstv %s143
        %v167 = vmul.f32 %v166, %v163
        %v168 = vstv %s148
        %v169 = vadd.f32 %v167, %v168
        %v170 = vstv %s150
        %v171 = vmul.f32 %v170, %v163
        %v172 = vstv %s155
        %v173 = vadd.f32 %v171, %v172
        %v174 = vsel %vm165, %v169, %v173
        %v175 = vstv %s145
        %v176 = vstv %s152
        %v177 = vsel %vm165, %v175, %v176
        %v178 = vstv %s156
        %v179 = vmul.f32 %v178, %v163
        %v180 = vstv %s159
        %v181 = vadd.f32 %v179, %v180
        %v182 = vlaneseq
        %v183 = vshrl.u32 %v182, 7
        %v184 = vadd.s32 %v183, 8
        %v185 = vcvt.s32.f32 %v183
        %v186 = vcvt.s32.f32 %v184
        %v187 = vmul.f32 %v177, %v185
        %v188 = vmul.f32 %v177, %v186
        %v189 = vadd.f32 %v174, %v187
        %v190 = vadd.f32 %v174, %v188
        %v191 = vstv %s157
        %v192 = vmul.f32 %v191, %v185
        %v193 = vmul.f32 %v191, %v186
        %v194 = vadd.f32 %v181, %v192
        %v195 = vadd.f32 %v181, %v193
        %v196 = vrcp.pop %v194
        %v197 = vrcp.pop %v195
        %v198 = vmul.f32 %v194, %v196
        %v199 = vmul.f32 %v195, %v197
        %v200 = vsub.f32 2.0, %v198
        %v201 = vsub.f32 2.0, %v199
        %v202 = vmul.f32 %v196, %v200
        %v203 = vmul.f32 %v197, %v201
        %v204 = vmul.f32 %v189, %v202
        %v205 = vmul.f32 %v190, %v203
        %v206 = vsub.f32 %v204, 1.0
        %v207 = vsub.f32 %v205, 1.0
        %vm208 = vcmask 261120
        %209 = vst.msk [vmem:[%s120] sm:$0xff] %vm208, %v206
        %210 = vst.msk [vmem:[%s120 + $0x8] sm:$0xff] %vm208, %v207
        %s211 = sand.u32 %s59, 1
        %s212 = scalar_lea.sflag [#allocation3], %s211
        %s213 = sand.u32 %s59, 1
        %s214 = smul.addr %s213, 16
        %s215 = scalar_lea.vmem [#allocation5], %s214
        // Predicated region
        $region29: #{tpu_custom_call.1} parent=23 // pred_check
          %p216 = pneg %p69
        $region30: #{tpu_custom_call.1} parent=23 // pred_check_branch
          %218 = sbr.rel (%p216) target = $region32
        $region31: #{tpu_custom_call.1} parent=23 // pred_region
          %s219 = smul.u32 2, %s21
          %s221 = ssub.s32 256, 256
          %222 = vsyncadd %s212, %s221
          %s223 = smul.addr %s20, 2
          %s224 = sadd.s32 %s219, %s223
          %s225 = smul.addr %s224, 128
          %s226 = scalar_lea.hbm %s1, %s225
          %s227 = sshll.u32 %s215, 4
          %s228 = int_to_ptr.vmem [resolvable:$true] %s227
          %233 = dma.vmem_to_hbm [thread:$0]  %s228, 256, %s226, %s212, 128, 128, 8
        $region32: #{tpu_custom_call.1} parent=23 // pred_fallthru
          _
      $region24: #{tpu_custom_call.1} parent=5 // pred_fallthru
        _
      %p234 = scmp.le.s32.totalorder 2, %s11
      // Predicated region
      $region33: #{tpu_custom_call.1} parent=5 // pred_check
        %p235 = pneg %p234
      $region34: #{tpu_custom_call.1} parent=5 // pred_check_branch
        %237 = sbr.rel (%p235) target = $region36
      $region35: #{tpu_custom_call.1} parent=5 // pred_region
        %s238 = ssub.s32 %s11, 2
        // Predicated region
        $region37: #{tpu_custom_call.1} parent=35 // pred_check
          %p239 = pneg %p75
        $region38: #{tpu_custom_call.1} parent=35 // pred_check_branch
          %241 = sbr.rel (%p239) target = $region40
        $region39: #{tpu_custom_call.1} parent=35 // pred_region
          %s242 = sand.u32 %s60, 1
          %s243 = scalar_lea.sflag [#allocation3], %s242
          %s244 = sand.u32 %s60, 1
          %s245 = smul.addr %s244, 16
          %s246 = scalar_lea.vmem [#allocation5], %s245
          %247 = dma.done %s243, 256
        $region40: #{tpu_custom_call.1} parent=35 // pred_fallthru
          _
      $region36: #{tpu_custom_call.1} parent=5 // pred_fallthru
        _
    $region6: #{tpu_custom_call.1} parent=1 // loop_footer
      %s15 = sadd.s32 1, %s11
    $region7: #{tpu_custom_call.1} parent=1 // loop_footer_branch
      %10 = sbr.rel target = $region3
    $region8: #{tpu_custom_call.1} parent=1 // loop_exit
      _
    %248 = vsyncpa [#allocation3], 1
    %s249 = scalar_lea.sflag [#allocation3], 1
    %250 = vsyncpa %s249, 1
    %251 = vsyncpa [#allocation4], 1
    %s252 = scalar_lea.sflag [#allocation4], 1
    %253 = vsyncpa %s252, 1

</llo_original>
